<compile_context>
chip_gen: v5e
topology: v5e:2x2
jax: 0.10.0
libtpu: 0.0.40
codegen_flags: <defaults>
</compile_context>

<pallas_src>
import functools

import jax
import jax.numpy as jnp
from jax import lax
from jax.experimental import pallas as pl
from jax.experimental.pallas import tpu as pltpu


def _pick_batch_tile(B):
    # Largest multiple of 8 (f32 sublane) <= min(B, 512). Keeps the
    # double-buffered working set tiny on every generation (incl. v7x's
    # smaller VMEM) while amortizing per-step pipeline overhead.
    tb = min(B, 512)
    return max(8, (tb // 8) * 8)


# ---------------------------------------------------------------------------
# Inference kernel: y_pred = sigmoid(x @ W.T + b)
# ---------------------------------------------------------------------------
def linear_sigmoid_kernel(x_ref, wt_ref, b_ref, o_ref):
    x = x_ref[...]                                        # (TB, D)
    wt = wt_ref[...]                                      # (D, C)  pre-transposed
    b = b_ref[...]                                        # (1, C)
    logits = jnp.dot(x, wt, preferred_element_type=jnp.float32) + b
    o_ref[...] = jax.nn.sigmoid(logits).astype(o_ref.dtype)


def linear_sigmoid(x, w, b):
    B, D = x.shape
    C = w.shape[0]
    TB = _pick_batch_tile(B)
    return pl.pallas_call(
        linear_sigmoid_kernel,
        out_shape=jax.ShapeDtypeStruct((B, C), jnp.float32),
        grid=(pl.cdiv(B, TB),),
        in_specs=[
            pl.BlockSpec((TB, D), lambda i: (i, 0)),      # x tile
            pl.BlockSpec((D, C), lambda i: (0, 0)),       # W^T, resident
            pl.BlockSpec((1, C), lambda i: (0, 0)),       # bias, resident
        ],
        out_specs=pl.BlockSpec((TB, C), lambda i: (i, 0)),
        compiler_params=pltpu.CompilerParams(
            dimension_semantics=("parallel",)),           # megacore on v7x
    )(x, w.T, b.reshape(1, C))


# ---------------------------------------------------------------------------
# Fused training kernel (one launch):
#   y_pred = sigmoid(x W^T + b)                       -> VMEM output
#   loss   = mean_i( logsumexp(y_pred_i) - y_pred_i[y_i] )  -> SMEM (1,1)
# ---------------------------------------------------------------------------
def fused_loss_pred_kernel(x_ref, wt_ref, b_ref, y_ref, pred_ref, loss_ref,
                           *, total_rows):
    i = pl.program_id(0)
    tb = x_ref.shape[0]

    x = x_ref[...]                                        # (TB, D) f32
    wt = wt_ref[...]                                      # (D, C)  f32
    b = b_ref[...]                                        # (1, C)  f32
    labels = y_ref[...]                                   # (TB, 1) int32

    logits = jnp.dot(x, wt, preferred_element_type=jnp.float32) + b
    p = jax.nn.sigmoid(logits)                            # (TB, C)
    pred_ref[...] = p.astype(pred_ref.dtype)

    # sigmoid outputs live in (0,1): unstabilized logsumexp is safe (exp <= e).
    lse = jnp.log(jnp.sum(jnp.exp(p), axis=-1, keepdims=True))          # (TB, 1)

    # Gather p[i, y_i] via compare+select (no f32 one-hot multiply).
    col = lax.broadcasted_iota(jnp.int32, p.shape, 1)                   # (TB, C)
    picked = jnp.sum(jnp.where(col == labels, p, 0.0),
                     axis=-1, keepdims=True)                            # (TB, 1)

    per_row = lse - picked                                              # (TB, 1)

    # Zero out batch-padding rows of the last (partial) tile.
    row = lax.broadcasted_iota(jnp.int32, per_row.shape, 0) + i * tb
    per_row = jnp.where(row < total_rows, per_row, 0.0)

    @pl.when(i == 0)
    def _():
        loss_ref[0, 0] = 0.0

    loss_ref[0, 0] += jnp.sum(per_row) * (1.0 / total_rows)


def fused_loss_and_pred(x, w, b, y):
    """Single pallas_call returning (scalar loss, y_pred)."""
    B, D = x.shape
    C = w.shape[0]
    TB = _pick_batch_tile(B)
    smem = pltpu.MemorySpace.SMEM
    pred, loss = pl.pallas_call(
        functools.partial(fused_loss_pred_kernel, total_rows=B),
        out_shape=(
            jax.ShapeDtypeStruct((B, C), jnp.float32),    # y_pred
            jax.ShapeDtypeStruct((1, 1), jnp.float32),    # loss (scalar)
        ),
        grid=(pl.cdiv(B, TB),),
        in_specs=[
            pl.BlockSpec((TB, D), lambda i: (i, 0)),      # x tile
            pl.BlockSpec((D, C), lambda i: (0, 0)),       # W^T, resident
            pl.BlockSpec((1, C), lambda i: (0, 0)),       # bias, resident
            pl.BlockSpec((TB, 1), lambda i: (i, 0)),      # labels tile (int32)
        ],
        out_specs=(
            pl.BlockSpec((TB, C), lambda i: (i, 0)),
            pl.BlockSpec((1, 1), lambda i: (0, 0), memory_space=smem),
        ),
        # Batch axis carries the scalar-loss reduction (resident accumulator
        # across grid steps) -> must be "arbitrary"; batch-parallelism across
        # v7x cores would require per-core partial losses instead.
        compiler_params=pltpu.CompilerParams(
            dimension_semantics=("arbitrary",)),
    )(x, w.T, b.reshape(1, C), y.astype(jnp.int32).reshape(B, 1))
    return loss[0, 0], pred


# ---------------------------------------------------------------------------
# TorchModel.forward equivalent
# ---------------------------------------------------------------------------
def torch_model_forward(x, w, b, y=None):
    if y is not None:
        loss, _ = fused_loss_and_pred(x, w, b, y)   # y_pred available for free
        return loss
    return linear_sigmoid(x, w, b)


# Pure-JAX reference (same math as the PyTorch module) for correctness checks.
def _ref_forward(x, w, b, y=None):
    p = jax.nn.sigmoid(x @ w.T + b)
    if y is None:
        return p
    lse = jax.nn.logsumexp(p, axis=-1)
    picked = jnp.take_along_axis(p, y[:, None], axis=-1)[:, 0]
    return jnp.mean(lse - picked)


if __name__ == "__main__":
    input_size = 32
    batch = 8
    num_classes = 5

    key = jax.random.PRNGKey(0)
    kx, kw, kb, ky = jax.random.split(key, 4)

    # nn.Linear-style uniform(-1/sqrt(D), 1/sqrt(D)) init.
    bound = 1.0 / (input_size ** 0.5)
    w = jax.random.uniform(kw, (num_classes, input_size), jnp.float32, -bound, bound)
    b = jax.random.uniform(kb, (num_classes,), jnp.float32, -bound, bound)

    x = jax.random.normal(kx, (batch, input_size), jnp.float32)
    y = jax.random.randint(ky, (batch,), 0, num_classes, dtype=jnp.int32)

    # Inference path (y=None).
    y_pred = torch_model_forward(x, w, b)
    jax.block_until_ready(y_pred)

    # Training path: one fused launch gives both loss and predictions.
    loss, y_pred_fused = fused_loss_and_pred(x, w, b, y)
    jax.block_until_ready(loss)

    # Module-faithful training call (returns just the loss).
    loss_only = torch_model_forward(x, w, b, y)
    jax.block_until_ready(loss_only)

    assert y_pred.shape == (batch, num_classes)
    assert loss.shape == ()

    # Correctness vs. pure-JAX reference.
    ref_pred = _ref_forward(x, w, b)
    ref_loss = _ref_forward(x, w, b, y)
    assert jnp.allclose(y_pred, ref_pred, rtol=1e-5, atol=1e-5)
    assert jnp.allclose(y_pred_fused, ref_pred, rtol=1e-5, atol=1e-5)
    assert jnp.allclose(loss, ref_loss, rtol=1e-5, atol=1e-5)
    assert jnp.allclose(loss_only, ref_loss, rtol=1e-5, atol=1e-5)

    print("KERNEL_OK")
</pallas_src>

<mosaic_0001>
module attributes {stable_mosaic.version = 11 : i64} {
  func.func @linear_sigmoid_kernel(%arg0: i32, %arg1: memref<8x32xf32, #tpu.memory_space<vmem>>, %arg2: memref<32x5xf32, #tpu.memory_space<vmem>>, %arg3: memref<1x5xf32, #tpu.memory_space<vmem>>, %arg4: memref<8x5xf32, #tpu.memory_space<vmem>>) attributes {dimension_semantics = [#tpu.dimension_semantics<parallel>], iteration_bounds = array<i64: 1>, scalar_prefetch = 0 : i64, scratch_operands = 0 : i64, tpu.core_type = #tpu.core_type<tc>, window_params = [{transform_indices = @transform_0, window_bounds = array<i64: 8, 32>}, {pipeline_mode = #tpu.pipeline_mode<synchronous>, transform_indices = @transform_1, window_bounds = array<i64: 32, 5>}, {pipeline_mode = #tpu.pipeline_mode<synchronous>, transform_indices = @transform_2, window_bounds = array<i64: 1, 5>}, {transform_indices = @transform_3, window_bounds = array<i64: 8, 5>}]} {
    %c0 = arith.constant 0 : index
    %c0_0 = arith.constant 0 : index
    %0 = vector.load %arg1[%c0, %c0_0] : memref<8x32xf32, #tpu.memory_space<vmem>>, vector<8x32xf32>
    %c0_1 = arith.constant 0 : index
    %c0_2 = arith.constant 0 : index
    %1 = vector.load %arg2[%c0_1, %c0_2] : memref<32x5xf32, #tpu.memory_space<vmem>>, vector<32x5xf32>
    %c0_3 = arith.constant 0 : index
    %c0_4 = arith.constant 0 : index
    %2 = vector.load %arg3[%c0_3, %c0_4] : memref<1x5xf32, #tpu.memory_space<vmem>>, vector<1x5xf32>
    %cst = arith.constant dense<0.000000e+00> : vector<8x5xf32>
    %3 = tpu.matmul %0, %1, %cst {dimension_numbers = #tpu.dot_dimension_numbers<[1], [0], [0], [1], [0, 0, 1, 1], [], []>} : vector<8x32xf32>, vector<32x5xf32>, vector<8x5xf32> -> vector<8x5xf32>
    %4 = vector.broadcast %2 : vector<1x5xf32> to vector<8x5xf32>
    %5 = arith.addf %3, %4 : vector<8x5xf32>
    %6 = arith.negf %5 : vector<8x5xf32>
    %7 = math.exp %6 : vector<8x5xf32>
    %cst_5 = arith.constant 1.000000e+00 : f32
    %8 = vector.broadcast %cst_5 : f32 to vector<8x5xf32>
    %9 = arith.addf %8, %7 : vector<8x5xf32>
    %10 = arith.divf %8, %9 : vector<8x5xf32>
    %c0_6 = arith.constant 0 : index
    %c0_7 = arith.constant 0 : index
    %11 = vector.load %arg4[%c0_6, %c0_7] : memref<8x5xf32, #tpu.memory_space<vmem>>, vector<8x5xf32>
    tpu.vector_store %arg4[%c0_6, %c0_7], %10 {strides = array<i32>} : memref<8x5xf32, #tpu.memory_space<vmem>>, vector<8x5xf32>,
    return
  }
  func.func @transform_0(%arg0: i32) -> (i32, i32) {
    %c0_i32 = arith.constant 0 : i32
    %c0_i32_0 = arith.constant 0 : i32
    return %arg0, %c0_i32 : i32, i32
  }
  func.func @transform_1(%arg0: i32) -> (i32, i32) {
    %c0_i32 = arith.constant 0 : i32
    %c0_i32_0 = arith.constant 0 : i32
    %c0_i32_1 = arith.constant 0 : i32
    return %c0_i32, %c0_i32_0 : i32, i32
  }
  func.func @transform_2(%arg0: i32) -> (i32, i32) {
    %c0_i32 = arith.constant 0 : i32
    %c0_i32_0 = arith.constant 0 : i32
    %c0_i32_1 = arith.constant 0 : i32
    return %c0_i32, %c0_i32_0 : i32, i32
  }
  func.func @transform_3(%arg0: i32) -> (i32, i32) {
    %c0_i32 = arith.constant 0 : i32
    %c0_i32_0 = arith.constant 0 : i32
    return %arg0, %c0_i32 : i32, i32
  }
}

</mosaic_0001>

<llo_original>
// kernel: tpu_custom_call.1
$region0: #{tpu_custom_call.1}
  #allocation0 [shape = 'u32[]', space=smem, size = 0x4, offset = 0x4, fixed_abs, tag = 'smem constant byte address 0x4 - core index']
  #allocation1 [shape = 'u32[72,128]{1,0:T(1,128)}', space=vmem, size = 0x9000, scoped, tag = 'internal scratch']
  %s0 = inlined_call_operand.vmem [shape: f32[8,32], index: 0, kind: input, shape index: {}]
  %s1 = inlined_call_operand.vmem [shape: f32[32,5], index: 1, kind: input, shape index: {}]
  %s2 = inlined_call_operand.vmem [shape: f32[1,5], index: 2, kind: input, shape index: {}]
  %s3 = inlined_call_operand.hbm [shape: f32[8,5], index: 3, kind: output, shape index: {}]
  %s4 = sld [smem:[#allocation0]]
  $region22: #{tpu_custom_call.1} parent=0
    _
  %s6 = ssub.s32 1, %s4
  %s7 = scalar_select 0, %s6, %s4
  $region1: #{tpu_custom_call.1} parent=0
    #allocation2 [shape = 'u8[4096]{0}', space=vmem, size = 0x1000, scoped, tag = 'output window, operand 0, single buffered']
    #allocation3 [shape = 's32[1]{0}', space=sflag, size = 0x4, scoped, tag = 'scoped memory for tpu_custom_call.1']
    %8 = vsyncpa [#allocation3], 0
    // Predicated region
    $region2: #{tpu_custom_call.1} parent=1 // pred_check
      _
    $region3: #{tpu_custom_call.1} parent=1 // pred_check_branch
      %10 = sbr.rel (0) target = $region5
    $region4: #{tpu_custom_call.1} parent=1 // pred_region
      _
    $region5: #{tpu_custom_call.1} parent=1 // pred_fallthru
      _
    // Predicated region
    $region6: #{tpu_custom_call.1} parent=1 // pred_check
      _
    $region7: #{tpu_custom_call.1} parent=1 // pred_check_branch
      %12 = sbr.rel (0) target = $region9
    $region8: #{tpu_custom_call.1} parent=1 // pred_region
      _
    $region9: #{tpu_custom_call.1} parent=1 // pred_fallthru
      _
    // Predicated region
    $region10: #{tpu_custom_call.1} parent=1 // pred_check
      _
    $region11: #{tpu_custom_call.1} parent=1 // pred_check_branch
      %14 = sbr.rel (0) target = $region13
    $region12: #{tpu_custom_call.1} parent=1 // pred_region
      _
    $region13: #{tpu_custom_call.1} parent=1 // pred_fallthru
      _
    %v15 = vld [vmem:[%s0] sm:$0xff]
    %v16 = vld [vmem:[%s1] sm:$0xff]
    %v17 = vld [vmem:[%s1 + $0x8] sm:$0xff]
    %v18 = vld [vmem:[%s1 + $0x10] sm:$0xff]
    %v19 = vld [vmem:[%s1 + $0x18] sm:$0xff]
    %v20 = vld [vmem:[%s2] sm:$0x1]
    %v22 = vperm.slane %v20, 0
    %vm24 = vcmask 261120
    %v26 = vsel %vm24, %v15, 0
    %28 = vmatpush.msra.mxu0 0.0
    %29 = vmatpush.msra.mxu0 0.0
    %30 = vmatpush.msra.mxu0 0.0
    %31 = vmatpush.msra.mxu0 0.0
    %32 = vmatpush.msra.mxu0 0.0
    %33 = vmatpush.msra.mxu0 0.0
    %34 = vmatpush.msra.mxu0 0.0
    %35 = vmatpush.msra.mxu0 0.0
    %36 = vmatpush.msra.mxu0 0.0
    %37 = vmatpush.msra.mxu0 0.0
    %38 = vmatpush.msra.mxu0 0.0
    %39 = vmatpush.msra.mxu0 0.0
    %40 = vmatpush.msra.mxu0 %v19
    %41 = vmatpush.msra.mxu0 %v18
    %42 = vmatpush.msra.mxu0 %v17
    %43 = vmatpush.msra.mxu0 %v16
    %44 = vmatmul.f32.gmra.mxu0 %v26
    %v45 = vpop.f32.mrf.mxu0
    %v46 = vadd.f32 %v22, %v45
    %47 = vdwg.mxu0
    %v48 = vxor.u32 %v46, 2147483648
    %v49 = vmul.f32 %v48, 1.442695
    %v50 = vpow.pop %v49
    %v51 = vadd.f32 %v50, 1.0
    %v52 = vrcp.pop %v51
    %v53 = vmul.f32 %v51, %v52
    %v54 = vsub.f32 1.0, %v53
    %v55 = vmul.f32 %v52, %v54
    %v56 = vadd.f32 %v52, %v55
    %vm57 = vweird.f32 %v51
    %vm58 = vweird.f32 %v52
    %vm59 = vmor %vm57, %vm58
    %v60 = vsel %vm59, %v52, %v56
    %v61 = vand.u32 2147483647, %v51
    %vm62 = vcmp.eq.f32.partialorder %v61, 8.507059e+37
    %v63 = vand.u32 %v51, 2147483648
    %v64 = vor.u32 1.1754944e-38, %v63
    %v65 = vsel %vm62, %v64, %v60
    %v66 = vmul.f32 1.0, %v65
    %vm67 = vcmask 39936
    %68 = vst.msk [vmem:[#allocation2] sm:$0xff] %vm67, %v66
    // Predicated region
    $region14: #{tpu_custom_call.1} parent=1 // pred_check
      _
    $region15: #{tpu_custom_call.1} parent=1 // pred_check_branch
      %70 = sbr.rel (0) target = $region17
    $region16: #{tpu_custom_call.1} parent=1 // pred_region
      %72 = vsyncadd [#allocation3], 0
      %s74 = sshll.u32 [#allocation2], 4
      %s75 = int_to_ptr.vmem [resolvable:$true] %s74
      %s76 = sshll.u32 %s3, 4
      %s77 = int_to_ptr.hbm [resolvable:$true] %s76
      %79 = dma.vmem_to_hbm [thread:$0]  %s75, 128, %s77, [#allocation3]
    $region17: #{tpu_custom_call.1} parent=1 // pred_fallthru
      _
    // Predicated region
    $region18: #{tpu_custom_call.1} parent=1 // pred_check
      _
    $region19: #{tpu_custom_call.1} parent=1 // pred_check_branch
      %81 = sbr.rel (0) target = $region21
    $region20: #{tpu_custom_call.1} parent=1 // pred_region
      %83 = dma.done [#allocation3], 128
    $region21: #{tpu_custom_call.1} parent=1 // pred_fallthru
      _
    %84 = vsyncpa [#allocation3], 1

</llo_original>
